<compile_context>
chip_gen: v5e
topology: v5e:2x2
jax: 0.10.0
libtpu: 0.0.40
codegen_flags: <defaults>
</compile_context>

<pallas_src>
import jax
import jax.numpy as jnp
from jax import lax
from jax.experimental import pallas as pl
from jax.experimental.pallas import tpu as pltpu

NUM_EMBEDDINGS = 100   # vocab size per table (fixed by the module)
NUM_TABLES = 9         # module allocates 9 tables; forward uses edge_attr.size(1)
VOCAB_PAD = 128        # vocab padded to one full lane width


def _edge_encoder_kernel_rows(idx_ref, tab_ref, out_ref):
    """Row layout (used when H >= 128).

    idx_ref: (TE, F)      int32  VMEM
    tab_ref: (F*128, H)   f32    VMEM (stacked, vocab-padded tables)
    out_ref: (TE, H)      f32    VMEM
    """
    te, num_feat = idx_ref.shape
    idx = idx_ref[...]                                          # (TE, F)
    iota = lax.broadcasted_iota(jnp.int32, (te, VOCAB_PAD), 1)  # (TE, 128)
    # One 128-lane one-hot band per feature; concatenated along lanes they
    # form the (TE, F*128) multi-hot for a single fused MXU matmul.
    pieces = [(idx[:, f:f + 1] == iota).astype(jnp.float32)
              for f in range(num_feat)]
    onehot = pieces[0] if num_feat == 1 else jnp.concatenate(pieces, axis=1)
    out_ref[...] = jnp.dot(onehot, tab_ref[...],
                           preferred_element_type=jnp.float32)


def _edge_encoder_kernel_cols(idx_ref, tab_ref, out_ref):
    """Transposed layout (used when H < 128) -> lane-dense output stores.

    idx_ref: (F, TE)      int32  VMEM
    tab_ref: (H, F*128)   f32    VMEM (stacked, vocab-padded tables, transposed)
    out_ref: (H, TE)      f32    VMEM (edge tile on the 128-lane axis)
    """
    num_feat, te = idx_ref.shape
    idx = idx_ref[...]                                          # (F, TE)
    iota = lax.broadcasted_iota(jnp.int32, (VOCAB_PAD, te), 0)  # (128, TE)
    pieces = [(idx[f:f + 1, :] == iota).astype(jnp.float32)
              for f in range(num_feat)]
    onehot = pieces[0] if num_feat == 1 else jnp.concatenate(pieces, axis=0)
    out_ref[...] = jnp.dot(tab_ref[...], onehot,                # (H, TE)
                           preferred_element_type=jnp.float32)


def edge_encoder(edge_attr, emb_tables, *, tile_e=512):
    """Pallas EdgeEncoder forward.

    edge_attr:  (E,) or (E, F) integer array, F <= 9, values in [0, 100)
    emb_tables: (NUM_TABLES, 100, H) f32 stacked embedding weights
    returns:    (E, H) f32
    """
    if edge_attr.ndim == 1:
        edge_attr = edge_attr[:, None]
    edge_attr = edge_attr.astype(jnp.int32)
    E, F = edge_attr.shape
    assert 1 <= F <= NUM_TABLES, F
    emb_tables = emb_tables.astype(jnp.float32)
    V, H = emb_tables.shape[1], emb_tables.shape[2]

    # Stack only the F used tables (matches the PyTorch loop) and zero-pad the
    # vocab 100 -> 128 once, so the kernel's one-hot / K dim is lane aligned.
    used = emb_tables[:F]                                        # (F, V, H)
    used = jnp.pad(used, ((0, 0), (0, VOCAB_PAD - V), (0, 0)))   # (F, 128, H)
    stacked = used.reshape(F * VOCAB_PAD, H)                     # (F*128, H)

    cost = pl.CostEstimate(
        flops=2 * E * F * VOCAB_PAD * H,
        transcendentals=0,
        bytes_accessed=E * F * 4 + F * VOCAB_PAD * H * 4 + E * H * 4,
    )
    cparams = pltpu.CompilerParams(dimension_semantics=("parallel",))

    if H < 128:
        # ---- transposed formulation: output last dim = edge tile (>=128) ----
        idx_t = edge_attr.T                                      # (F, E)
        tab_t = stacked.T                                        # (H, F*128)
        if E <= tile_e:
            tile = E                                             # single block
        else:
            tile = max(128, (min(tile_e, E) // 128) * 128)       # lane-aligned
        grid = (pl.cdiv(E, tile),)
        out_t = pl.pallas_call(
            _edge_encoder_kernel_cols,
            out_shape=jax.ShapeDtypeStruct((H, E), jnp.float32),
            grid_spec=pltpu.PrefetchScalarGridSpec(
                num_scalar_prefetch=0,
                grid=grid,
                in_specs=[
                    pl.BlockSpec((F, tile), lambda i: (0, i)),
                    # Constant block index: tables stay resident across steps.
                    pl.BlockSpec((H, F * VOCAB_PAD), lambda i: (0, 0)),
                ],
                out_specs=pl.BlockSpec((H, tile), lambda i: (0, i)),
            ),
            compiler_params=cparams,
            cost_estimate=cost,
        )(idx_t, tab_t)
        return out_t.T                                           # (E, H)
    else:
        # ---- row formulation: output is already lane-dense (H >= 128) -------
        if E <= tile_e:
            tile = E
        else:
            tile = max(8, (min(tile_e, E) // 8) * 8)
        grid = (pl.cdiv(E, tile),)
        out = pl.pallas_call(
            _edge_encoder_kernel_rows,
            out_shape=jax.ShapeDtypeStruct((E, H), jnp.float32),
            grid_spec=pltpu.PrefetchScalarGridSpec(
                num_scalar_prefetch=0,
                grid=grid,
                in_specs=[
                    pl.BlockSpec((tile, F), lambda i: (i, 0)),
                    pl.BlockSpec((F * VOCAB_PAD, H), lambda i: (0, 0)),
                ],
                out_specs=pl.BlockSpec((tile, H), lambda i: (i, 0)),
            ),
            compiler_params=cparams,
            cost_estimate=cost,
        )(edge_attr, stacked)
        return out


def init_edge_encoder_params(key, hidden_channels):
    # PyTorch Embedding default init: weight ~ N(0, 1)
    return jax.random.normal(
        key, (NUM_TABLES, NUM_EMBEDDINGS, hidden_channels), dtype=jnp.float32)


def edge_encoder_ref(edge_attr, emb_tables):
    """Pure-JAX reference matching the PyTorch forward."""
    if edge_attr.ndim == 1:
        edge_attr = edge_attr[:, None]
    out = 0
    for i in range(edge_attr.shape[1]):
        out = out + emb_tables[i][edge_attr[:, i]]
    return out


if __name__ == "__main__":
    key = jax.random.PRNGKey(0)
    k0, k1, k2, k3, k4 = jax.random.split(key, 5)

    # --- test 1: small H (transposed path), single block ---------------------
    hidden = 32
    E, F = 16, 3
    tables32 = init_edge_encoder_params(k0, hidden)
    ea1 = jax.random.randint(k1, (E, F), 0, NUM_EMBEDDINGS, dtype=jnp.int32)
    out1 = jax.block_until_ready(edge_encoder(ea1, tables32))
    ref1 = edge_encoder_ref(ea1, tables32)
    assert out1.shape == (E, hidden), out1.shape
    assert jnp.allclose(out1, ref1, atol=1e-5, rtol=1e-5), "test1 mismatch"

    # --- test 2: small H, ragged multi-block grid (transposed path) ----------
    E2, F2 = 200, 4
    ea2 = jax.random.randint(k2, (E2, F2), 0, NUM_EMBEDDINGS, dtype=jnp.int32)
    out2 = jax.block_until_ready(edge_encoder(ea2, tables32, tile_e=128))
    ref2 = edge_encoder_ref(ea2, tables32)
    assert jnp.allclose(out2, ref2, atol=1e-5, rtol=1e-5), "test2 mismatch"

    # --- test 3: H >= 128 (row path), ragged multi-block grid ----------------
    tables128 = init_edge_encoder_params(k3, 128)
    E3, F3 = 300, 5
    ea3 = jax.random.randint(k4, (E3, F3), 0, NUM_EMBEDDINGS, dtype=jnp.int32)
    out3 = jax.block_until_ready(edge_encoder(ea3, tables128, tile_e=128))
    ref3 = edge_encoder_ref(ea3, tables128)
    assert jnp.allclose(out3, ref3, atol=1e-5, rtol=1e-5), "test3 mismatch"

    # --- test 4: 1-D edge_attr (dim()==1 branch of the PyTorch forward) ------
    ea4 = ea1[:, 0]
    out4 = jax.block_until_ready(edge_encoder(ea4, tables32))
    ref4 = edge_encoder_ref(ea4, tables32)
    assert jnp.allclose(out4, ref4, atol=1e-5, rtol=1e-5), "test4 mismatch"

    print("KERNEL_OK")
</pallas_src>

<mosaic_0001>
module attributes {stable_mosaic.version = 11 : i64} {
  func.func @_edge_encoder_kernel_cols(%arg0: i32, %arg1: memref<3x16xi32, #tpu.memory_space<vmem>>, %arg2: memref<32x384xf32, #tpu.memory_space<vmem>>, %arg3: memref<32x16xf32, #tpu.memory_space<vmem>>) attributes {dimension_semantics = [#tpu.dimension_semantics<parallel>], iteration_bounds = array<i64: 1>, scalar_prefetch = 0 : i64, scratch_operands = 0 : i64, tpu.core_type = #tpu.core_type<tc>, window_params = [{transform_indices = @transform_0, window_bounds = array<i64: 3, 16>}, {pipeline_mode = #tpu.pipeline_mode<synchronous>, transform_indices = @transform_1, window_bounds = array<i64: 32, 384>}, {transform_indices = @transform_2, window_bounds = array<i64: 32, 16>}]} {
    %c0 = arith.constant 0 : index
    %c0_0 = arith.constant 0 : index
    %0 = vector.load %arg1[%c0, %c0_0] : memref<3x16xi32, #tpu.memory_space<vmem>>, vector<3x16xi32>
    %1 = tpu.iota {dimensions = array<i32: 0>} : vector<128x16xi32>
    %2 = vector.extract_strided_slice %0 {offsets = [0, 0], sizes = [1, 16], strides = [1, 1]} : vector<3x16xi32> to vector<1x16xi32>
    %3 = vector.broadcast %2 : vector<1x16xi32> to vector<128x16xi32>
    %4 = arith.cmpi eq, %3, %1 : vector<128x16xi32>
    %5 = arith.extui %4 : vector<128x16xi1> to vector<128x16xi32>
    %6 = arith.sitofp %5 : vector<128x16xi32> to vector<128x16xf32>
    %7 = vector.extract_strided_slice %0 {offsets = [1, 0], sizes = [1, 16], strides = [1, 1]} : vector<3x16xi32> to vector<1x16xi32>
    %8 = vector.broadcast %7 : vector<1x16xi32> to vector<128x16xi32>
    %9 = arith.cmpi eq, %8, %1 : vector<128x16xi32>
    %10 = arith.extui %9 : vector<128x16xi1> to vector<128x16xi32>
    %11 = arith.sitofp %10 : vector<128x16xi32> to vector<128x16xf32>
    %12 = vector.extract_strided_slice %0 {offsets = [2, 0], sizes = [1, 16], strides = [1, 1]} : vector<3x16xi32> to vector<1x16xi32>
    %13 = vector.broadcast %12 : vector<1x16xi32> to vector<128x16xi32>
    %14 = arith.cmpi eq, %13, %1 : vector<128x16xi32>
    %15 = arith.extui %14 : vector<128x16xi1> to vector<128x16xi32>
    %16 = arith.sitofp %15 : vector<128x16xi32> to vector<128x16xf32>
    %17 = tpu.concatenate %6, %11, %16 in 0 : vector<128x16xf32>, vector<128x16xf32>, vector<128x16xf32> -> vector<384x16xf32>
    %c0_1 = arith.constant 0 : index
    %c0_2 = arith.constant 0 : index
    %18 = vector.load %arg2[%c0_1, %c0_2] : memref<32x384xf32, #tpu.memory_space<vmem>>, vector<32x384xf32>
    %cst = arith.constant dense<0.000000e+00> : vector<32x16xf32>
    %19 = tpu.matmul %18, %17, %cst {dimension_numbers = #tpu.dot_dimension_numbers<[1], [0], [0], [1], [0, 0, 1, 1], [], []>} : vector<32x384xf32>, vector<384x16xf32>, vector<32x16xf32> -> vector<32x16xf32>
    %c0_3 = arith.constant 0 : index
    %c0_4 = arith.constant 0 : index
    %20 = vector.load %arg3[%c0_3, %c0_4] : memref<32x16xf32, #tpu.memory_space<vmem>>, vector<32x16xf32>
    tpu.vector_store %arg3[%c0_3, %c0_4], %19 {strides = array<i32>} : memref<32x16xf32, #tpu.memory_space<vmem>>, vector<32x16xf32>,
    return
  }
  func.func @transform_0(%arg0: i32) -> (i32, i32) {
    %c0_i32 = arith.constant 0 : i32
    %c0_i32_0 = arith.constant 0 : i32
    return %c0_i32, %arg0 : i32, i32
  }
  func.func @transform_1(%arg0: i32) -> (i32, i32) {
    %c0_i32 = arith.constant 0 : i32
    %c0_i32_0 = arith.constant 0 : i32
    %c0_i32_1 = arith.constant 0 : i32
    return %c0_i32, %c0_i32_0 : i32, i32
  }
  func.func @transform_2(%arg0: i32) -> (i32, i32) {
    %c0_i32 = arith.constant 0 : i32
    %c0_i32_0 = arith.constant 0 : i32
    return %c0_i32, %arg0 : i32, i32
  }
}

</mosaic_0001>

<llo_original>
// kernel: tpu_custom_call.1
$region0: #{tpu_custom_call.1}
  #allocation0 [shape = 'u32[]', space=smem, size = 0x4, offset = 0x4, fixed_abs, tag = 'smem constant byte address 0x4 - core index']
  #allocation1 [shape = 'u32[72,128]{1,0:T(1,128)}', space=vmem, size = 0x9000, scoped, tag = 'internal scratch']
  %s0 = inlined_call_operand.hbm [shape: s32[3,16], index: 0, kind: input, shape index: {}]
  %s1 = inlined_call_operand.hbm [shape: f32[32,384], index: 1, kind: input, shape index: {}]
  %s2 = inlined_call_operand.vmem [shape: f32[32,16], index: 2, kind: output, shape index: {}]
  %s3 = sld [smem:[#allocation0]]
  $region26: #{tpu_custom_call.1} parent=0
    _
  %s5 = ssub.s32 1, %s3
  %s6 = scalar_select 0, %s5, %s3
  $region1: #{tpu_custom_call.1} parent=0
    #allocation2 [shape = 'u8[2048]{0}', space=vmem, size = 0x800, scoped, tag = 'input window, operand 0, single buffered']
    #allocation3 [shape = 's32[1]{0}', space=sflag, size = 0x4, scoped, tag = 'scoped memory for tpu_custom_call.1']
    #allocation4 [shape = 'u8[49152]{0}', space=vmem, size = 0xc000, scoped, tag = 'input window, operand 1, single buffered']
    #allocation5 [shape = 's32[1]{0}', space=sflag, size = 0x4, scoped, tag = 'scoped memory for tpu_custom_call.1']
    %7 = vsyncpa [#allocation3], 0
    %8 = vsyncpa [#allocation5], 0
    // Predicated region
    $region2: #{tpu_custom_call.1} parent=1 // pred_check
      _
    $region3: #{tpu_custom_call.1} parent=1 // pred_check_branch
      %10 = sbr.rel (0) target = $region5
    $region4: #{tpu_custom_call.1} parent=1 // pred_region
      %12 = vsyncadd [#allocation3], 0
      %s14 = sshll.u32 %s0, 4
      %s15 = int_to_ptr.hbm [resolvable:$true] %s14
      %s16 = sshll.u32 [#allocation2], 4
      %s17 = int_to_ptr.vmem [resolvable:$true] %s16
      %19 = dma.hbm_to_vmem [thread:$0]  %s15, 64, %s17, [#allocation3]
    $region5: #{tpu_custom_call.1} parent=1 // pred_fallthru
      _
    // Predicated region
    $region6: #{tpu_custom_call.1} parent=1 // pred_check
      _
    $region7: #{tpu_custom_call.1} parent=1 // pred_check_branch
      %21 = sbr.rel (0) target = $region9
    $region8: #{tpu_custom_call.1} parent=1 // pred_region
      %23 = vsyncadd [#allocation5], 0
      %s24 = sshll.u32 %s1, 4
      %s25 = int_to_ptr.hbm [resolvable:$true] %s24
      %s26 = sshll.u32 [#allocation4], 4
      %s27 = int_to_ptr.vmem [resolvable:$true] %s26
      %32 = dma.hbm_to_vmem [thread:$0]  %s25, 1536, %s27, [#allocation5], 384, 384, 24
    $region9: #{tpu_custom_call.1} parent=1 // pred_fallthru
      _
    // Predicated region
    $region10: #{tpu_custom_call.1} parent=1 // pred_check
      _
    $region11: #{tpu_custom_call.1} parent=1 // pred_check_branch
      %34 = sbr.rel (0) target = $region13
    $region12: #{tpu_custom_call.1} parent=1 // pred_region
      %36 = dma.done [#allocation3], 64
    $region13: #{tpu_custom_call.1} parent=1 // pred_fallthru
      _
    // Predicated region
    $region14: #{tpu_custom_call.1} parent=1 // pred_check
      _
    $region15: #{tpu_custom_call.1} parent=1 // pred_check_branch
      %38 = sbr.rel (0) target = $region17
    $region16: #{tpu_custom_call.1} parent=1 // pred_region
      %40 = dma.done [#allocation5], 1536
    $region17: #{tpu_custom_call.1} parent=1 // pred_fallthru
      _
    %v41 = vld [vmem:[#allocation2] sm:$0x7]
    %v42 = vlaneseq
    %v43 = vshrl.u32 %v42, 7
    %v44 = vadd.s32 %v43, 8
    %v45 = vadd.s32 %v43, 16
    %v46 = vadd.s32 %v43, 24
    %v47 = vadd.s32 %v43, 32
    %v48 = vadd.s32 %v43, 40
    %v49 = vadd.s32 %v43, 48
    %v50 = vadd.s32 %v43, 56
    %v51 = vadd.s32 %v43, 64
    %v52 = vadd.s32 %v43, 72
    %v53 = vadd.s32 %v43, 80
    %v54 = vadd.s32 %v43, 88
    %v55 = vadd.s32 %v43, 96
    %v56 = vadd.s32 %v43, 104
    %v57 = vadd.s32 %v43, 112
    %v58 = vadd.s32 %v43, 120
    %v59 = vperm.slane %v41, 0
    %vm60 = vcmp.eq.s32.totalorder %v59, %v43
    %vm61 = vcmp.eq.s32.totalorder %v59, %v44
    %vm62 = vcmp.eq.s32.totalorder %v59, %v45
    %vm63 = vcmp.eq.s32.totalorder %v59, %v46
    %vm64 = vcmp.eq.s32.totalorder %v59, %v47
    %vm65 = vcmp.eq.s32.totalorder %v59, %v48
    %vm66 = vcmp.eq.s32.totalorder %v59, %v49
    %vm67 = vcmp.eq.s32.totalorder %v59, %v50
    %vm68 = vcmp.eq.s32.totalorder %v59, %v51
    %vm69 = vcmp.eq.s32.totalorder %v59, %v52
    %vm70 = vcmp.eq.s32.totalorder %v59, %v53
    %vm71 = vcmp.eq.s32.totalorder %v59, %v54
    %vm72 = vcmp.eq.s32.totalorder %v59, %v55
    %vm73 = vcmp.eq.s32.totalorder %v59, %v56
    %vm74 = vcmp.eq.s32.totalorder %v59, %v57
    %vm75 = vcmp.eq.s32.totalorder %v59, %v58
    %v76 = vsel %vm60, 1, 0
    %v77 = vsel %vm61, 1, 0
    %v78 = vsel %vm62, 1, 0
    %v79 = vsel %vm63, 1, 0
    %v80 = vsel %vm64, 1, 0
    %v81 = vsel %vm65, 1, 0
    %v82 = vsel %vm66, 1, 0
    %v83 = vsel %vm67, 1, 0
    %v84 = vsel %vm68, 1, 0
    %v85 = vsel %vm69, 1, 0
    %v86 = vsel %vm70, 1, 0
    %v87 = vsel %vm71, 1, 0
    %v88 = vsel %vm72, 1, 0
    %v89 = vsel %vm73, 1, 0
    %v90 = vsel %vm74, 1, 0
    %v91 = vsel %vm75, 1, 0
    %v92 = vcvt.s32.f32 %v76
    %v93 = vcvt.s32.f32 %v77
    %v94 = vcvt.s32.f32 %v78
    %v95 = vcvt.s32.f32 %v79
    %v96 = vcvt.s32.f32 %v80
    %v97 = vcvt.s32.f32 %v81
    %v98 = vcvt.s32.f32 %v82
    %v99 = vcvt.s32.f32 %v83
    %v100 = vcvt.s32.f32 %v84
    %v101 = vcvt.s32.f32 %v85
    %v102 = vcvt.s32.f32 %v86
    %v103 = vcvt.s32.f32 %v87
    %v104 = vcvt.s32.f32 %v88
    %v105 = vcvt.s32.f32 %v89
    %v106 = vcvt.s32.f32 %v90
    %v107 = vcvt.s32.f32 %v91
    %v108 = vperm.slane %v41, 1
    %vm109 = vcmp.eq.s32.totalorder %v108, %v43
    %vm110 = vcmp.eq.s32.totalorder %v108, %v44
    %vm111 = vcmp.eq.s32.totalorder %v108, %v45
    %vm112 = vcmp.eq.s32.totalorder %v108, %v46
    %vm113 = vcmp.eq.s32.totalorder %v108, %v47
    %vm114 = vcmp.eq.s32.totalorder %v108, %v48
    %vm115 = vcmp.eq.s32.totalorder %v108, %v49
    %vm116 = vcmp.eq.s32.totalorder %v108, %v50
    %vm117 = vcmp.eq.s32.totalorder %v108, %v51
    %vm118 = vcmp.eq.s32.totalorder %v108, %v52
    %vm119 = vcmp.eq.s32.totalorder %v108, %v53
    %vm120 = vcmp.eq.s32.totalorder %v108, %v54
    %vm121 = vcmp.eq.s32.totalorder %v108, %v55
    %vm122 = vcmp.eq.s32.totalorder %v108, %v56
    %vm123 = vcmp.eq.s32.totalorder %v108, %v57
    %vm124 = vcmp.eq.s32.totalorder %v108, %v58
    %v125 = vsel %vm109, 1, 0
    %v126 = vsel %vm110, 1, 0
    %v127 = vsel %vm111, 1, 0
    %v128 = vsel %vm112, 1, 0
    %v129 = vsel %vm113, 1, 0
    %v130 = vsel %vm114, 1, 0
    %v131 = vsel %vm115, 1, 0
    %v132 = vsel %vm116, 1, 0
    %v133 = vsel %vm117, 1, 0
    %v134 = vsel %vm118, 1, 0
    %v135 = vsel %vm119, 1, 0
    %v136 = vsel %vm120, 1, 0
    %v137 = vsel %vm121, 1, 0
    %v138 = vsel %vm122, 1, 0
    %v139 = vsel %vm123, 1, 0
    %v140 = vsel %vm124, 1, 0
    %v141 = vcvt.s32.f32 %v125
    %v142 = vcvt.s32.f32 %v126
    %v143 = vcvt.s32.f32 %v127
    %v144 = vcvt.s32.f32 %v128
    %v145 = vcvt.s32.f32 %v129
    %v146 = vcvt.s32.f32 %v130
    %v147 = vcvt.s32.f32 %v131
    %v148 = vcvt.s32.f32 %v132
    %v149 = vcvt.s32.f32 %v133
    %v150 = vcvt.s32.f32 %v134
    %v151 = vcvt.s32.f32 %v135
    %v152 = vcvt.s32.f32 %v136
    %v153 = vcvt.s32.f32 %v137
    %v154 = vcvt.s32.f32 %v138
    %v155 = vcvt.s32.f32 %v139
    %v156 = vcvt.s32.f32 %v140
    %v157 = vperm.slane %v41, 2
    %vm158 = vcmp.eq.s32.totalorder %v157, %v43
    %vm159 = vcmp.eq.s32.totalorder %v157, %v44
    %vm160 = vcmp.eq.s32.totalorder %v157, %v45
    %vm161 = vcmp.eq.s32.totalorder %v157, %v46
    %vm162 = vcmp.eq.s32.totalorder %v157, %v47
    %vm163 = vcmp.eq.s32.totalorder %v157, %v48
    %vm164 = vcmp.eq.s32.totalorder %v157, %v49
    %vm165 = vcmp.eq.s32.totalorder %v157, %v50
    %vm166 = vcmp.eq.s32.totalorder %v157, %v51
    %vm167 = vcmp.eq.s32.totalorder %v157, %v52
    %vm168 = vcmp.eq.s32.totalorder %v157, %v53
    %vm169 = vcmp.eq.s32.totalorder %v157, %v54
    %vm170 = vcmp.eq.s32.totalorder %v157, %v55
    %vm171 = vcmp.eq.s32.totalorder %v157, %v56
    %vm172 = vcmp.eq.s32.totalorder %v157, %v57
    %vm173 = vcmp.eq.s32.totalorder %v157, %v58
    %v174 = vsel %vm158, 1, 0
    %v175 = vsel %vm159, 1, 0
    %v176 = vsel %vm160, 1, 0
    %v177 = vsel %vm161, 1, 0
    %v178 = vsel %vm162, 1, 0
    %v179 = vsel %vm163, 1, 0
    %v180 = vsel %vm164, 1, 0
    %v181 = vsel %vm165, 1, 0
    %v182 = vsel %vm166, 1, 0
    %v183 = vsel %vm167, 1, 0
    %v184 = vsel %vm168, 1, 0
    %v185 = vsel %vm169, 1, 0
    %v186 = vsel %vm170, 1, 0
    %v187 = vsel %vm171, 1, 0
    %v188 = vsel %vm172, 1, 0
    %v189 = vsel %vm173, 1, 0
    %v190 = vcvt.s32.f32 %v174
    %v191 = vcvt.s32.f32 %v175
    %v192 = vcvt.s32.f32 %v176
    %v193 = vcvt.s32.f32 %v177
    %v194 = vcvt.s32.f32 %v178
    %v195 = vcvt.s32.f32 %v179
    %v196 = vcvt.s32.f32 %v180
    %v197 = vcvt.s32.f32 %v181
    %v198 = vcvt.s32.f32 %v182
    %v199 = vcvt.s32.f32 %v183
    %v200 = vcvt.s32.f32 %v184
    %v201 = vcvt.s32.f32 %v185
    %v202 = vcvt.s32.f32 %v186
    %v203 = vcvt.s32.f32 %v187
    %v204 = vcvt.s32.f32 %v188
    %v205 = vcvt.s32.f32 %v189
    %v206 = vld [vmem:[#allocation4] sm:$0xff]
    %v207 = vld [vmem:[#allocation4 + $0x8] sm:$0xff]
    %v208 = vld [vmem:[#allocation4 + $0x10] sm:$0xff]
    %v209 = vld [vmem:[#allocation4 + $0x18] sm:$0xff]
    %v210 = vld [vmem:[#allocation4 + $0x20] sm:$0xff]
    %v211 = vld [vmem:[#allocation4 + $0x28] sm:$0xff]
    %v212 = vld [vmem:[#allocation4 + $0x30] sm:$0xff]
    %v213 = vld [vmem:[#allocation4 + $0x38] sm:$0xff]
    %v214 = vld [vmem:[#allocation4 + $0x40] sm:$0xff]
    %v215 = vld [vmem:[#allocation4 + $0x48] sm:$0xff]
    %v216 = vld [vmem:[#allocation4 + $0x50] sm:$0xff]
    %v217 = vld [vmem:[#allocation4 + $0x58] sm:$0xff]
    %218 = vmatpush.msra.mxu0 %v107
    %219 = vmatpush.msra.mxu0 %v106
    %220 = vmatpush.msra.mxu0 %v105
    %221 = vmatpush.msra.mxu0 %v104
    %222 = vmatpush.msra.mxu0 %v103
    %223 = vmatpush.msra.mxu0 %v102
    %224 = vmatpush.msra.mxu0 %v101
    %225 = vmatpush.msra.mxu0 %v100
    %226 = vmatpush.msra.mxu0 %v99
    %227 = vmatpush.msra.mxu0 %v98
    %228 = vmatpush.msra.mxu0 %v97
    %229 = vmatpush.msra.mxu0 %v96
    %230 = vmatpush.msra.mxu0 %v95
    %231 = vmatpush.msra.mxu0 %v94
    %232 = vmatpush.msra.mxu0 %v93
    %233 = vmatpush.msra.mxu0 %v92
    %234 = vmatmul.f32.gmra.mxu0 %v206
    %v235 = vpop.f32.mrf.mxu0
    %v236 = vadd.f32 0.0, %v235
    %237 = vmatmul.f32.gmra.mxu0 %v209
    %v238 = vpop.f32.mrf.mxu0
    %v239 = vadd.f32 0.0, %v238
    %240 = vmatmul.f32.gmra.mxu0 %v212
    %v241 = vpop.f32.mrf.mxu0
    %v242 = vadd.f32 0.0, %v241
    %243 = vmatmul.f32.gmra.mxu0 %v215
    %v244 = vpop.f32.mrf.mxu0
    %v245 = vadd.f32 0.0, %v244
    %246 = vdwg.mxu0
    %247 = vmatpush.msra.mxu0 %v156
    %248 = vmatpush.msra.mxu0 %v155
    %249 = vmatpush.msra.mxu0 %v154
    %250 = vmatpush.msra.mxu0 %v153
    %251 = vmatpush.msra.mxu0 %v152
    %252 = vmatpush.msra.mxu0 %v151
    %253 = vmatpush.msra.mxu0 %v150
    %254 = vmatpush.msra.mxu0 %v149
    %255 = vmatpush.msra.mxu0 %v148
    %256 = vmatpush.msra.mxu0 %v147
    %257 = vmatpush.msra.mxu0 %v146
    %258 = vmatpush.msra.mxu0 %v145
    %259 = vmatpush.msra.mxu0 %v144
    %260 = vmatpush.msra.mxu0 %v143
    %261 = vmatpush.msra.mxu0 %v142
    %262 = vmatpush.msra.mxu0 %v141
    %263 = vmatmul.f32.gmra.mxu0 %v207
    %v264 = vpop.f32.mrf.mxu0
    %v265 = vadd.f32 %v236, %v264
    %266 = vmatmul.f32.gmra.mxu0 %v210
    %v267 = vpop.f32.mrf.mxu0
    %v268 = vadd.f32 %v239, %v267
    %269 = vmatmul.f32.gmra.mxu0 %v213
    %v270 = vpop.f32.mrf.mxu0
    %v271 = vadd.f32 %v242, %v270
    %272 = vmatmul.f32.gmra.mxu0 %v216
    %v273 = vpop.f32.mrf.mxu0
    %v274 = vadd.f32 %v245, %v273
    %275 = vdwg.mxu0
    %276 = vmatpush.msra.mxu0 %v205
    %277 = vmatpush.msra.mxu0 %v204
    %278 = vmatpush.msra.mxu0 %v203
    %279 = vmatpush.msra.mxu0 %v202
    %280 = vmatpush.msra.mxu0 %v201
    %281 = vmatpush.msra.mxu0 %v200
    %282 = vmatpush.msra.mxu0 %v199
    %283 = vmatpush.msra.mxu0 %v198
    %284 = vmatpush.msra.mxu0 %v197
    %285 = vmatpush.msra.mxu0 %v196
    %286 = vmatpush.msra.mxu0 %v195
    %287 = vmatpush.msra.mxu0 %v194
    %288 = vmatpush.msra.mxu0 %v193
    %289 = vmatpush.msra.mxu0 %v192
    %290 = vmatpush.msra.mxu0 %v191
    %291 = vmatpush.msra.mxu0 %v190
    %292 = vmatmul.f32.gmra.mxu0 %v208
    %v293 = vpop.f32.mrf.mxu0
    %v294 = vadd.f32 %v265, %v293
    %295 = vmatmul.f32.gmra.mxu0 %v211
    %v296 = vpop.f32.mrf.mxu0
    %v297 = vadd.f32 %v268, %v296
    %298 = vmatmul.f32.gmra.mxu0 %v214
    %v299 = vpop.f32.mrf.mxu0
    %v300 = vadd.f32 %v271, %v299
    %301 = vmatmul.f32.gmra.mxu0 %v217
    %v302 = vpop.f32.mrf.mxu0
    %v303 = vadd.f32 %v274, %v302
    %304 = vdwg.mxu0
    %vm305 = vcmask 130048
    %306 = vst.msk [vmem:[%s2] sm:$0xff] %vm305, %v294
    %307 = vst.msk [vmem:[%s2 + $0x8] sm:$0xff] %vm305, %v297
    %308 = vst.msk [vmem:[%s2 + $0x10] sm:$0xff] %vm305, %v300
    %309 = vst.msk [vmem:[%s2 + $0x18] sm:$0xff] %vm305, %v303
    // Predicated region
    $region18: #{tpu_custom_call.1} parent=1 // pred_check
      _
    $region19: #{tpu_custom_call.1} parent=1 // pred_check_branch
      %311 = sbr.rel (0) target = $region21
    $region20: #{tpu_custom_call.1} parent=1 // pred_region
      _
    $region21: #{tpu_custom_call.1} parent=1 // pred_fallthru
      _
    // Predicated region
    $region22: #{tpu_custom_call.1} parent=1 // pred_check
      _
    $region23: #{tpu_custom_call.1} parent=1 // pred_check_branch
      %313 = sbr.rel (0) target = $region25
    $region24: #{tpu_custom_call.1} parent=1 // pred_region
      _
    $region25: #{tpu_custom_call.1} parent=1 // pred_fallthru
      _
    %314 = vsyncpa [#allocation3], 1
    %315 = vsyncpa [#allocation5], 1

</llo_original>
